<compile_context>
chip_gen: v7x
topology: tpu7x:2x2x1
jax: 0.10.0
libtpu: 0.0.40
codegen_flags: <defaults>
</compile_context>

<pallas_src>
import math

import jax
import jax.numpy as jnp
from jax.experimental import pallas as pl
from jax.experimental.pallas import tpu as pltpu


def _cdiv(a: int, b: int) -> int:
    return -(-a // b)


def sinusoidal_pos_emb_kernel(t_ref, inv_denom_ref, phase_ref, group_ref, out_ref):
    """t_ref: (T, k) f32 packed time steps; inv_denom/phase: (1, k*D) f32;
    group: (1, k*D) int32 (lane j -> packed sub-row j // D); out_ref: (T, k*D)."""
    k = t_ref.shape[-1]
    group = group_ref[...]                                 # (1, k*D), VMEM-resident

    # Expand t to a lane-dense (T, k*D) tile: lane j carries t[:, j // D].
    # k is tiny and static, so this unrolls to (k-1) selects on full-width vregs.
    t_exp = t_ref[:, 0:1]                                  # (T, 1) -> broadcasts
    for g in range(1, k):
        t_exp = jnp.where(group == g, t_ref[:, g:g + 1], t_exp)

    # One mul + add (VPU) and one sin (EUP) per element; cos = sin(x + pi/2).
    arg = t_exp * inv_denom_ref[...] + phase_ref[...]
    out_ref[...] = jnp.sin(arg).astype(out_ref.dtype)


def sinusoidal_position_embeddings(time_step: jax.Array,
                                   embedding_dimension: int,
                                   out_dtype=jnp.float32) -> jax.Array:
    """in: [n_time_steps] -> out: [n_time_steps, embedding_dimension]."""
    d = int(embedding_dimension)
    assert d % 2 == 0 and d >= 4, "embedding_dimension must be even and >= 4"
    n = int(time_step.shape[0])
    half_d = d // 2

    # Lane packing factor: pack k logical rows per 128-lane output row when D < 128.
    k = 128 // d if (d < 128 and 128 % d == 0) else 1
    kd = k * d
    out_itemsize = jnp.dtype(out_dtype).itemsize

    # ---- column-only constants, hoisted out of the grid loop (wrapper-side) ----
    j = jnp.arange(d, dtype=jnp.int32)
    half_idx = (j // 2).astype(jnp.float32)
    inv_denom_row = jnp.exp((-math.log(10000.0) / (half_d - 1)) * half_idx)      # (d,)
    phase_row = (j % 2).astype(jnp.float32) * (math.pi / 2.0)                    # cos = sin(x+pi/2)
    inv_denom = jnp.tile(inv_denom_row, k).reshape(1, kd)
    phase = jnp.tile(phase_row, k).reshape(1, kd)
    group = jnp.repeat(jnp.arange(k, dtype=jnp.int32), d).reshape(1, kd)

    # ---- tile sizing: byte budget, not a row cap ----
    rows = _cdiv(n, k)
    # Per packed row, double-buffered: output tile bytes + lane-padded t tile
    # ((rows, k) f32 pads to 128 lanes in VMEM -> 512 B/row).
    per_row_bytes = 2 * (kd * out_itemsize + 128 * 4)
    budget_bytes = 8 * 1024 * 1024            # total; safe under scoped VMEM on v5e/v6e/v7x
    tile_rows = max(8, (budget_bytes // per_row_bytes) // 8 * 8)
    if rows <= 8:
        tile_rows = rows                      # single full-extent block (tiny case)
    elif rows <= tile_rows:
        # Keep >= 2 grid steps so the "parallel" axis can shard across v7x's 2 TCs.
        tile_rows = max(8, (rows // 2) // 8 * 8) if rows >= 16 else 8
    # NOTE: assumes realistic embedding dims (<= a few K); 8 rows x D x 4 B stays in budget.

    rows_pad = _cdiv(rows, tile_rows) * tile_rows
    n_pad = rows_pad * k

    t_flat = time_step.astype(jnp.float32).reshape(n)
    t_packed = jnp.zeros((n_pad,), jnp.float32).at[:n].set(t_flat).reshape(rows_pad, k)

    cost = pl.CostEstimate(
        flops=2 * n * d,                 # fused mul+add per element
        transcendentals=n * d,           # one sin per element; exp is wrapper-side only
        bytes_accessed=n * d * out_itemsize + n * 4,
    )

    out_padded = pl.pallas_call(
        sinusoidal_pos_emb_kernel,
        out_shape=jax.ShapeDtypeStruct((rows_pad, kd), out_dtype),
        grid=(rows_pad // tile_rows,),
        in_specs=[
            pl.BlockSpec((tile_rows, k), lambda i: (i, 0)),
            pl.BlockSpec((1, kd), lambda i: (0, 0)),   # constants: constant block index
            pl.BlockSpec((1, kd), lambda i: (0, 0)),   #   -> stay resident, no re-DMA
            pl.BlockSpec((1, kd), lambda i: (0, 0)),
        ],
        out_specs=pl.BlockSpec((tile_rows, kd), lambda i: (i, 0)),
        compiler_params=pltpu.CompilerParams(
            dimension_semantics=("parallel",),
            vmem_limit_bytes=32 * 1024 * 1024,
        ),
        cost_estimate=cost,
    )(t_packed, inv_denom, phase, group)

    # Row-major (rows_pad, k*D) is row-major (rows_pad*k, D): reshape is free.
    return out_padded.reshape(rows_pad * k, d)[:n]


def _reference(time_step: jax.Array, embedding_dimension: int) -> jax.Array:
    """Pure-JAX reference mirroring the PyTorch forward exactly."""
    half_d = embedding_dimension // 2
    i = jnp.arange(half_d, dtype=jnp.float32) / (half_d - 1)
    denom = jnp.exp(math.log(10000.0) * i)
    arg = time_step.astype(jnp.float32)[:, None] / denom[None, :]
    out = jnp.zeros((arg.shape[0], 2 * half_d), dtype=jnp.float32)
    out = out.at[:, 0::2].set(jnp.sin(arg))
    out = out.at[:, 1::2].set(jnp.cos(arg))
    return out


if __name__ == "__main__":
    key = jax.random.PRNGKey(0)
    n_time_steps = 8
    embedding_dimension = 32

    # Deterministic diffusion-style integer time steps, cast to float.
    time_step = jax.random.randint(key, (n_time_steps,), 0, 1000).astype(jnp.float32)

    out = sinusoidal_position_embeddings(time_step, embedding_dimension)
    out = jax.block_until_ready(out)
    ref = _reference(time_step, embedding_dimension)
    assert out.shape == (n_time_steps, embedding_dimension)
    assert out.dtype == jnp.float32
    # Tolerance covers f32 sin of large args (t up to ~1000) with cos folded as sin(x+pi/2).
    err = float(jnp.max(jnp.abs(out - ref)))
    assert err < 2e-3, f"mismatch (small case): max abs err {err}"

    # Second check: exercises lane packing, row padding, and the multi-step grid.
    t2 = jax.random.randint(jax.random.PRNGKey(0), (300,), 0, 1000).astype(jnp.float32)
    out2 = jax.block_until_ready(sinusoidal_position_embeddings(t2, embedding_dimension))
    ref2 = _reference(t2, embedding_dimension)
    assert out2.shape == (300, embedding_dimension)
    err2 = float(jnp.max(jnp.abs(out2 - ref2)))
    assert err2 < 2e-3, f"mismatch (tiled case): max abs err {err2}"

    print("KERNEL_OK")
</pallas_src>

<mosaic_0001>
module attributes {stable_mosaic.version = 11 : i64} {
  func.func @sinusoidal_pos_emb_kernel(%arg0: i32, %arg1: memref<2x4xf32, #tpu.memory_space<vmem>>, %arg2: memref<1x128xf32, #tpu.memory_space<vmem>>, %arg3: memref<1x128xf32, #tpu.memory_space<vmem>>, %arg4: memref<1x128xi32, #tpu.memory_space<vmem>>, %arg5: memref<2x128xf32, #tpu.memory_space<vmem>>) attributes {dimension_semantics = [#tpu.dimension_semantics<parallel>], iteration_bounds = array<i64: 1>, scalar_prefetch = 0 : i64, scratch_operands = 0 : i64, tpu.core_type = #tpu.core_type<tc>, window_params = [{transform_indices = @transform_0, window_bounds = array<i64: 2, 4>}, {pipeline_mode = #tpu.pipeline_mode<synchronous>, transform_indices = @transform_1, window_bounds = array<i64: 1, 128>}, {pipeline_mode = #tpu.pipeline_mode<synchronous>, transform_indices = @transform_2, window_bounds = array<i64: 1, 128>}, {pipeline_mode = #tpu.pipeline_mode<synchronous>, transform_indices = @transform_3, window_bounds = array<i64: 1, 128>}, {transform_indices = @transform_4, window_bounds = array<i64: 2, 128>}]} {
    %c0 = arith.constant 0 : index
    %c0_0 = arith.constant 0 : index
    %0 = vector.load %arg4[%c0, %c0_0] : memref<1x128xi32, #tpu.memory_space<vmem>>, vector<1x128xi32>
    %c0_1 = arith.constant 0 : index
    %c0_2 = arith.constant 0 : index
    %1 = vector.load %arg1[%c0_1, %c0_2] : memref<2x4xf32, #tpu.memory_space<vmem>>, vector<2x1xf32>
    %c1_i32 = arith.constant 1 : i32
    %2 = vector.broadcast %c1_i32 : i32 to vector<1x128xi32>
    %3 = arith.cmpi eq, %0, %2 : vector<1x128xi32>
    %c0_3 = arith.constant 0 : index
    %c1 = arith.constant 1 : index
    %4 = vector.load %arg1[%c0_3, %c1] : memref<2x4xf32, #tpu.memory_space<vmem>>, vector<2x1xf32>
    %5 = vector.shape_cast %3 : vector<1x128xi1> to vector<1x128xi1>
    %6 = vector.broadcast %5 : vector<1x128xi1> to vector<2x128xi1>
    %7 = vector.shape_cast %4 : vector<2x1xf32> to vector<2x1xf32>
    %8 = vector.broadcast %7 : vector<2x1xf32> to vector<2x128xf32>
    %9 = vector.shape_cast %1 : vector<2x1xf32> to vector<2x1xf32>
    %10 = vector.broadcast %9 : vector<2x1xf32> to vector<2x128xf32>
    %11 = arith.select %6, %8, %10 : vector<2x128xi1>, vector<2x128xf32>
    %c2_i32 = arith.constant 2 : i32
    %12 = vector.broadcast %c2_i32 : i32 to vector<1x128xi32>
    %13 = arith.cmpi eq, %0, %12 : vector<1x128xi32>
    %c0_4 = arith.constant 0 : index
    %c2 = arith.constant 2 : index
    %14 = vector.load %arg1[%c0_4, %c2] : memref<2x4xf32, #tpu.memory_space<vmem>>, vector<2x1xf32>
    %15 = vector.shape_cast %13 : vector<1x128xi1> to vector<1x128xi1>
    %16 = vector.broadcast %15 : vector<1x128xi1> to vector<2x128xi1>
    %17 = vector.shape_cast %14 : vector<2x1xf32> to vector<2x1xf32>
    %18 = vector.broadcast %17 : vector<2x1xf32> to vector<2x128xf32>
    %19 = arith.select %16, %18, %11 : vector<2x128xi1>, vector<2x128xf32>
    %c3_i32 = arith.constant 3 : i32
    %20 = vector.broadcast %c3_i32 : i32 to vector<1x128xi32>
    %21 = arith.cmpi eq, %0, %20 : vector<1x128xi32>
    %c0_5 = arith.constant 0 : index
    %c3 = arith.constant 3 : index
    %22 = vector.load %arg1[%c0_5, %c3] : memref<2x4xf32, #tpu.memory_space<vmem>>, vector<2x1xf32>
    %23 = vector.shape_cast %21 : vector<1x128xi1> to vector<1x128xi1>
    %24 = vector.broadcast %23 : vector<1x128xi1> to vector<2x128xi1>
    %25 = vector.shape_cast %22 : vector<2x1xf32> to vector<2x1xf32>
    %26 = vector.broadcast %25 : vector<2x1xf32> to vector<2x128xf32>
    %27 = arith.select %24, %26, %19 : vector<2x128xi1>, vector<2x128xf32>
    %c0_6 = arith.constant 0 : index
    %c0_7 = arith.constant 0 : index
    %28 = vector.load %arg2[%c0_6, %c0_7] : memref<1x128xf32, #tpu.memory_space<vmem>>, vector<1x128xf32>
    %29 = vector.broadcast %28 : vector<1x128xf32> to vector<2x128xf32>
    %30 = arith.mulf %27, %29 : vector<2x128xf32>
    %c0_8 = arith.constant 0 : index
    %c0_9 = arith.constant 0 : index
    %31 = vector.load %arg3[%c0_8, %c0_9] : memref<1x128xf32, #tpu.memory_space<vmem>>, vector<1x128xf32>
    %32 = vector.broadcast %31 : vector<1x128xf32> to vector<2x128xf32>
    %33 = arith.addf %30, %32 : vector<2x128xf32>
    %34 = math.sin %33 : vector<2x128xf32>
    %c0_10 = arith.constant 0 : index
    %c0_11 = arith.constant 0 : index
    %35 = vector.load %arg5[%c0_10, %c0_11] : memref<2x128xf32, #tpu.memory_space<vmem>>, vector<2x128xf32>
    tpu.vector_store %arg5[%c0_10, %c0_11], %34 {strides = array<i32>} : memref<2x128xf32, #tpu.memory_space<vmem>>, vector<2x128xf32>,
    return
  }
  func.func @transform_0(%arg0: i32) -> (i32, i32) {
    %c0_i32 = arith.constant 0 : i32
    %c0_i32_0 = arith.constant 0 : i32
    return %arg0, %c0_i32 : i32, i32
  }
  func.func @transform_1(%arg0: i32) -> (i32, i32) {
    %c0_i32 = arith.constant 0 : i32
    %c0_i32_0 = arith.constant 0 : i32
    %c0_i32_1 = arith.constant 0 : i32
    return %c0_i32, %c0_i32_0 : i32, i32
  }
  func.func @transform_2(%arg0: i32) -> (i32, i32) {
    %c0_i32 = arith.constant 0 : i32
    %c0_i32_0 = arith.constant 0 : i32
    %c0_i32_1 = arith.constant 0 : i32
    return %c0_i32, %c0_i32_0 : i32, i32
  }
  func.func @transform_3(%arg0: i32) -> (i32, i32) {
    %c0_i32 = arith.constant 0 : i32
    %c0_i32_0 = arith.constant 0 : i32
    %c0_i32_1 = arith.constant 0 : i32
    return %c0_i32, %c0_i32_0 : i32, i32
  }
  func.func @transform_4(%arg0: i32) -> (i32, i32) {
    %c0_i32 = arith.constant 0 : i32
    %c0_i32_0 = arith.constant 0 : i32
    return %arg0, %c0_i32 : i32, i32
  }
}

</mosaic_0001>

<llo_original>
// kernel: tpu_custom_call.1
$region0: #{tpu_custom_call.1}
  #allocation0 [shape = 'u32[]', space=smem, size = 0x4, offset = 0x4, fixed_abs, tag = 'smem constant byte address 0x4 - core index']
  #allocation1 [shape = 'u32[144,128]{1,0:T(1,128)}', space=vmem, size = 0x12000, scoped, tag = 'internal scratch']
  %s0 = inlined_call_operand.hbm [shape: f32[2,4], index: 0, kind: input, shape index: {}]
  %s1 = inlined_call_operand.vmem [shape: f32[1,128], index: 1, kind: input, shape index: {}]
  %s2 = inlined_call_operand.vmem [shape: f32[1,128], index: 2, kind: input, shape index: {}]
  %s3 = inlined_call_operand.vmem [shape: s32[1,128], index: 3, kind: input, shape index: {}]
  %s4 = inlined_call_operand.hbm [shape: f32[2,128], index: 4, kind: output, shape index: {}]
  %s5 = sld [smem:[#allocation0]]
  $region30: #{tpu_custom_call.1} parent=0
    _
  %s7 = ssub.s32 1, %s5
  %s8 = scalar_select 0, %s7, %s5
  $region1: #{tpu_custom_call.1} parent=0
    #allocation2 [shape = 'u8[1024]{0}', space=vmem, size = 0x400, scoped, tag = 'input window, operand 0, single buffered']
    #allocation3 [shape = 's32[1]{0}', space=sflag, size = 0x4, scoped, tag = 'scoped memory for tpu_custom_call.1']
    #allocation4 [shape = 's32[1]{0}', space=sflag, size = 0x4, scoped, tag = 'scoped memory for tpu_custom_call.1']
    #allocation5 [shape = 'u8[1024]{0}', space=vmem, size = 0x400, scoped, tag = 'output window, operand 0, single buffered']
    %9 = vsyncpa [#allocation3], 0
    %10 = vsyncpa [#allocation4], 0
    // Predicated region
    $region2: #{tpu_custom_call.1} parent=1 // pred_check
      _
    $region3: #{tpu_custom_call.1} parent=1 // pred_check_branch
      %12 = sbr.rel (0) target = $region5
    $region4: #{tpu_custom_call.1} parent=1 // pred_region
      %s14 = ssub.s32 32, 32
      %15 = vsyncadd [#allocation3], %s14
      %s17 = sshll.u32 [#allocation2], 4
      %s18 = int_to_ptr.vmem [resolvable:$true] %s17
      %20 = dma.hbm_to_vmem [thread:$0]  %s0, 32, %s18, [#allocation3]
    $region5: #{tpu_custom_call.1} parent=1 // pred_fallthru
      _
    // Predicated region
    $region6: #{tpu_custom_call.1} parent=1 // pred_check
      _
    $region7: #{tpu_custom_call.1} parent=1 // pred_check_branch
      %22 = sbr.rel (0) target = $region9
    $region8: #{tpu_custom_call.1} parent=1 // pred_region
      _
    $region9: #{tpu_custom_call.1} parent=1 // pred_fallthru
      _
    // Predicated region
    $region10: #{tpu_custom_call.1} parent=1 // pred_check
      _
    $region11: #{tpu_custom_call.1} parent=1 // pred_check_branch
      %24 = sbr.rel (0) target = $region13
    $region12: #{tpu_custom_call.1} parent=1 // pred_region
      _
    $region13: #{tpu_custom_call.1} parent=1 // pred_fallthru
      _
    // Predicated region
    $region14: #{tpu_custom_call.1} parent=1 // pred_check
      _
    $region15: #{tpu_custom_call.1} parent=1 // pred_check_branch
      %26 = sbr.rel (0) target = $region17
    $region16: #{tpu_custom_call.1} parent=1 // pred_region
      _
    $region17: #{tpu_custom_call.1} parent=1 // pred_fallthru
      _
    // Predicated region
    $region18: #{tpu_custom_call.1} parent=1 // pred_check
      _
    $region19: #{tpu_custom_call.1} parent=1 // pred_check_branch
      %28 = sbr.rel (0) target = $region21
    $region20: #{tpu_custom_call.1} parent=1 // pred_region
      %29 = dma.done [#allocation3], 32
    $region21: #{tpu_custom_call.1} parent=1 // pred_fallthru
      _
    %v30 = vld [vmem:[%s3] sm:$0x1]
    %v31 = vld [vmem:[#allocation2] sm:$0x3]
    %vm32 = vcmp.eq.s32.totalorder %v30, 1
    %v33 = vsel %vm32, 1, 0
    %v34 = vlaneseq
    %v35 = vshrl.u32 %v34, 7
    %v36 = vsub.s32 0, %v35
    %v37 = vrot.slane %v33, %v36
    %vm38 = vcmp.eq.s32.totalorder %v37, 1
    %40 = vset.pattern.permute.xlu0 1
    %41 = vperm.xlu0 %40, %v31
    %v42 = vpop.permute.xlu0 %41
    %44 = vset.pattern.permute.xlu0 0
    %45 = vperm.xlu0 %44, %v31
    %v46 = vpop.permute.xlu0 %45
    %v48 = vsel %vm38, %v42, %v46
    %vm49 = vcmp.eq.s32.totalorder %v30, 2
    %v50 = vsel %vm49, 1, 0
    %v51 = vlaneseq
    %v52 = vshrl.u32 %v51, 7
    %v53 = vsub.s32 0, %v52
    %v54 = vrot.slane %v50, %v53
    %vm55 = vcmp.eq.s32.totalorder %v54, 1
    %56 = vset.pattern.permute.xlu0 2
    %57 = vperm.xlu0 %56, %v31
    %v58 = vpop.permute.xlu0 %57
    %v60 = vsel %vm55, %v58, %v48
    %vm61 = vcmp.eq.s32.totalorder %v30, 3
    %v62 = vsel %vm61, 1, 0
    %v63 = vlaneseq
    %v64 = vshrl.u32 %v63, 7
    %v65 = vsub.s32 0, %v64
    %v66 = vrot.slane %v62, %v65
    %vm67 = vcmp.eq.s32.totalorder %v66, 1
    %68 = vset.pattern.permute.xlu0 3
    %69 = vperm.xlu0 %68, %v31
    %v70 = vpop.permute.xlu0 %69
    %v72 = vsel %vm67, %v70, %v60
    %v73 = vld [vmem:[%s1] sm:$0x1]
    %v75 = vlaneseq
    %v76 = vshrl.u32 %v75, 7
    %v77 = vsub.s32 0, %v76
    %v78 = vrot.slane %v73, %v77
    %v80 = vmul.f32 %v72, %v78
    %v81 = vld [vmem:[%s2] sm:$0x1]
    %v83 = vlaneseq
    %v84 = vshrl.u32 %v83, 7
    %v85 = vsub.s32 0, %v84
    %v86 = vrot.slane %v81, %v85
    %v88 = vadd.f32 %v80, %v86
    %v89 = vand.u32 2147483647, %v88
    %vm90 = vcmp.le.f32.partialorder %v89, 0.7853982
    %vm91 = vcmp.lt.s32.totalorder %v88, 0
    %v92 = vand.u32 %v88, 2139095040
    %v93 = vshrl.u32 %v92, 23
    %v94 = vsub.s32 %v93, 127
    %v95 = vand.u32 2147483647, %v88
    %v96 = vand.u32 %v95, 8388607
    %v97 = vor.u32 %v96, 8388608
    %v98 = vsub.s32 0, %v97
    %v99 = vadd.s32 %v94, 1
    %vm100 = vcmp.gt.s32.totalorder %v99, 0
    %v101 = vsel %vm100, %v99, 0
    %v102 = vshrl.u32 %v101, 5
    %v103 = vand.u32 %v101, 31
    %v104 = vsub.s32 32, %v103
    %v105 = vshrl.u32 683565275, %v104
    %v106 = vshll.u32 683565275, %v103
    %v107 = vshrl.u32 2475754826, %v104
    %v108 = vor.u32 %v106, %v107
    %v109 = vshll.u32 2475754826, %v103
    %v110 = vshrl.u32 2131351028, %v104
    %v111 = vor.u32 %v109, %v110
    %v112 = vshll.u32 2131351028, %v103
    %v113 = vshrl.u32 2102212464, %v104
    %v114 = vor.u32 %v112, %v113
    %v115 = vshll.u32 2102212464, %v103
    %v116 = vshrl.u32 920167782, %v104
    %v117 = vor.u32 %v115, %v116
    %v118 = vshll.u32 920167782, %v103
    %v119 = vshrl.u32 1326507024, %v104
    %v120 = vor.u32 %v118, %v119
    %vm121 = vcmp.lt.s32.totalorder %v102, 1
    %vm122 = vcmp.lt.s32.totalorder %v102, 2
    %vm123 = vcmp.lt.s32.totalorder %v102, 3
    %vm124 = vcmp.lt.s32.totalorder %v102, 4
    %v125 = vsel %vm121, %v105, %v108
    %v126 = vsel %vm124, %v114, 2102212464
    %v127 = vsel %vm123, %v111, %v126
    %v128 = vsel %vm122, %v125, %v127
    %v129 = vsel %vm121, %v108, %v111
    %v130 = vsel %vm124, %v117, 920167782
    %v131 = vsel %vm123, %v114, %v130
    %v132 = vsel %vm122, %v129, %v131
    %v133 = vsel %vm121, %v111, %v114
    %v134 = vsel %vm124, %v120, 1326507024
    %v135 = vsel %vm123, %v117, %v134
    %v136 = vsel %vm122, %v133, %v135
    %v137 = vshll.u32 %v97, 8
    %v138 = vmul.u32.u64.compose %v137, %v136
    %v139 = vextract.low.u32 %v138
    %v140 = vextract.high.u32 %v138
    %v141 = vmul.u32.u64.compose %v137, %v132
    %v142 = vextract.low.u32 %v141
    %v143 = vextract.high.u32 %v141
    %v144 = vmul.u32 %v137, %v128
    %v145 = vadd.s32 %v140, %v142
    %vm146 = vc.u32 %v140, %v142
    %v147 = vadd.s32 %v143, 1
    %v148 = vsel %vm146, %v147, %v143
    %v149 = vadd.s32 %v144, %v148
    %v150 = vadd.s32 %v149, 536870912
    %v151 = vshrl.u32 %v150, 30
    %v152 = vshll.u32 %v151, 30
    %v153 = vsub.s32 %v149, %v152
    %vm154 = vcmp.lt.s32.totalorder %v153, 0
    %v155 = vsub.s32 0, %v153
    %v156 = vsel %vm154, %v155, %v153
    %v157 = vclz %v156
    %v158 = vsub.s32 %v157, 2
    %vm159 = vcmp.gt.s32.totalorder 0, %v158
    %v160 = vsel %vm159, 0, %v158
    %v161 = vsub.s32 32, %v160
    %v162 = vshll.u32 %v153, %v160
    %v163 = vshrl.u32 %v145, %v161
    %v164 = vor.u32 %v162, %v163
    %v165 = vsub.s32 4294967266, %v160
    %v166 = vadd.s32 %v165, 127
    %v167 = vshll.u32 %v166, 23
    %v168 = vor.u32 4788187, %v167
    %v169 = vand.u32 2147483647, %v168
    %v171 = vcvt.s32.f32 %v164
    %v172 = vmul.f32 %v171, %v169
    %v173 = vxor.u32 %v172, 2147483648
    %v174 = vsel %vm91, %v173, %v172
    %v175 = vsub.s32 4, %v151
    %v176 = vsel %vm91, %v175, %v151
    %v177 = vsel %vm90, %v88, %v174
    %v178 = vsel %vm90, 0, %v176
    %v179 = vcosq.f32.pop %v177
    %v180 = vsinq.f32.pop %v177
    %vm181 = vweird.f32 %v88
    %v182 = vadd.s32 %v178, 3
    %v183 = vand.u32 %v182, 3
    %vm184 = vcmp.lt.s32.totalorder %v183, 2
    %vm185 = vcmp.eq.s32.totalorder %v183, 0
    %v186 = vxor.u32 %v180, 2147483648
    %v187 = vsel %vm185, %v179, %v186
    %vm188 = vcmp.eq.s32.totalorder %v183, 2
    %v189 = vxor.u32 %v179, 2147483648
    %v190 = vsel %vm188, %v189, %v180
    %v191 = vsel %vm184, %v187, %v190
    %v192 = vsel %vm181, nan, %v191
    %193 = vst [vmem:[#allocation5] sm:$0x3] %v192
    // Predicated region
    $region22: #{tpu_custom_call.1} parent=1 // pred_check
      _
    $region23: #{tpu_custom_call.1} parent=1 // pred_check_branch
      %195 = sbr.rel (0) target = $region25
    $region24: #{tpu_custom_call.1} parent=1 // pred_region
      %s197 = ssub.s32 32, 32
      %198 = vsyncadd [#allocation4], %s197
      %s200 = sshll.u32 [#allocation5], 4
      %s201 = int_to_ptr.vmem [resolvable:$true] %s200
      %203 = dma.vmem_to_hbm [thread:$0]  %s201, 32, %s4, [#allocation4]
    $region25: #{tpu_custom_call.1} parent=1 // pred_fallthru
      _
    // Predicated region
    $region26: #{tpu_custom_call.1} parent=1 // pred_check
      _
    $region27: #{tpu_custom_call.1} parent=1 // pred_check_branch
      %205 = sbr.rel (0) target = $region29
    $region28: #{tpu_custom_call.1} parent=1 // pred_region
      %206 = dma.done [#allocation4], 32
    $region29: #{tpu_custom_call.1} parent=1 // pred_fallthru
      _
    %207 = vsyncpa [#allocation3], 1
    %208 = vsyncpa [#allocation4], 1

</llo_original>
